<compile_context>
chip_gen: v7x
topology: tpu7x:2x2x1
jax: 0.10.0
libtpu: 0.0.40
codegen_flags: <defaults>
</compile_context>

<pallas_src>
import jax
import jax.numpy as jnp
from jax.experimental import pallas as pl
from jax.experimental.pallas import tpu as pltpu


def _round_up(x, m):
    return (x + m - 1) // m * m


def _bpr_tile_kernel(users_ref, pos_ref, neg_ref,   # scalar-prefetch indices (SMEM)
                     utab_ref, itab_ref,            # augmented tables (HBM, pl.ANY)
                     out_ref,                       # (1, TB) output tile (VMEM)
                     ubuf, pbuf, nbuf, sems):       # VMEM scratch + DMA semaphores
    tb = ubuf.shape[0]
    base = pl.program_id(0) * tb

    # Issue one row-gather DMA per (user, pos, neg) index of this batch tile.
    # All 3*TB copies are in flight concurrently (one semaphore per stream).
    @pl.loop(0, tb)
    def _issue(j):
        u = users_ref[base + j]
        p = pos_ref[base + j]
        n = neg_ref[base + j]
        pltpu.make_async_copy(utab_ref.at[pl.ds(u, 1)],
                              ubuf.at[pl.ds(j, 1)], sems.at[0]).start()
        pltpu.make_async_copy(itab_ref.at[pl.ds(p, 1)],
                              pbuf.at[pl.ds(j, 1)], sems.at[1]).start()
        pltpu.make_async_copy(itab_ref.at[pl.ds(n, 1)],
                              nbuf.at[pl.ds(j, 1)], sems.at[2]).start()

    # Drain: one wait per issued copy (the wait descriptor only needs the same
    # size and semaphore as the matching start; dst rows cover the buffers so
    # subsequent reads are ordered after the waits).
    @pl.loop(0, tb)
    def _drain(j):
        pltpu.make_async_copy(utab_ref.at[pl.ds(0, 1)],
                              ubuf.at[pl.ds(j, 1)], sems.at[0]).wait()
        pltpu.make_async_copy(itab_ref.at[pl.ds(0, 1)],
                              pbuf.at[pl.ds(j, 1)], sems.at[1]).wait()
        pltpu.make_async_copy(itab_ref.at[pl.ds(0, 1)],
                              nbuf.at[pl.ds(j, 1)], sems.at[2]).wait()

    # pos_pred - neg_pred = sum_f u_aug * (i_aug[pos] - i_aug[neg])
    prod = ubuf[...] * (pbuf[...] - nbuf[...])                 # (TB, Fpad) on VPU
    ones_row = jnp.ones((1, prod.shape[1]), jnp.float32)
    # NT contraction ('of,bf->ob') puts the batch on the lane axis of the
    # result, giving a lane-dense (1, TB) store.
    out_ref[...] = jnp.einsum("of,bf->ob", ones_row, prod,
                              preferred_element_type=jnp.float32)


def bpr_forward(users, pos_items, neg_items,
                user_emb, item_emb, user_bias, item_bias, *, tile_b=128):
    n_users, n_factors = user_emb.shape
    n_items = item_emb.shape[0]
    B = users.shape[0]

    # ---- one-time parameter prep (amortized across calls) ----------------
    # Fold item_bias into the item table; pair it with a ones column on the
    # user table. user_bias cancels in pos - neg and is dropped.
    user_tab = jnp.concatenate(
        [user_emb.astype(jnp.float32), jnp.ones((n_users, 1), jnp.float32)], axis=1)
    item_tab = jnp.concatenate(
        [item_emb.astype(jnp.float32), item_bias.astype(jnp.float32)], axis=1)
    f1 = n_factors + 1
    fpad = _round_up(f1, 128)            # lane-align: 1 row == one 512B DMA
    user_tab = jnp.pad(user_tab, ((0, 0), (0, fpad - f1)))
    item_tab = jnp.pad(item_tab, ((0, 0), (0, fpad - f1)))

    # ---- batch tiling ------------------------------------------------------
    tb = min(tile_b, _round_up(B, 8))
    b_pad = _round_up(B, tb)
    n_tiles = b_pad // tb

    def _prep_idx(idx):
        idx = idx.astype(jnp.int32).reshape(-1)
        return jnp.pad(idx, (0, b_pad - B))   # padded rows gather row 0 (valid)

    users_p = _prep_idx(users)
    pos_p = _prep_idx(pos_items)
    neg_p = _prep_idx(neg_items)

    grid_spec = pltpu.PrefetchScalarGridSpec(
        num_scalar_prefetch=3,                       # users / pos / neg -> SMEM
        grid=(n_tiles,),
        in_specs=[
            pl.BlockSpec(memory_space=pl.ANY),       # user table stays in HBM
            pl.BlockSpec(memory_space=pl.ANY),       # item table stays in HBM
        ],
        out_specs=pl.BlockSpec((1, tb), lambda t, u, p, n: (0, t)),
        scratch_shapes=[
            pltpu.VMEM((tb, fpad), jnp.float32),     # gathered user rows
            pltpu.VMEM((tb, fpad), jnp.float32),     # gathered pos item rows
            pltpu.VMEM((tb, fpad), jnp.float32),     # gathered neg item rows
            pltpu.SemaphoreType.DMA((3,)),
        ],
    )

    out = pl.pallas_call(
        _bpr_tile_kernel,
        out_shape=jax.ShapeDtypeStruct((1, b_pad), jnp.float32),
        grid_spec=grid_spec,
        compiler_params=pltpu.CompilerParams(
            dimension_semantics=("parallel",)),
    )(users_p, pos_p, neg_p, user_tab, item_tab)

    # matches preds.squeeze() difference in the PyTorch module -> shape (B,)
    return out[0, :B]


def reference_forward(users, pos_items, neg_items,
                      user_emb, item_emb, user_bias, item_bias):
    def pred(u, i):
        return (user_bias[u, 0] + item_bias[i, 0]
                + jnp.sum(user_emb[u] * item_emb[i], axis=1))
    return pred(users, pos_items) - pred(users, neg_items)


if __name__ == "__main__":
    n_users, n_items, n_factors = 16, 32, 40
    B = 8

    key = jax.random.PRNGKey(0)
    k1, k2, k3, k4, k5, k6, k7 = jax.random.split(key, 7)

    # Deterministic parameter init (nn.Embedding default: N(0, 1)).
    user_emb = jax.random.normal(k1, (n_users, n_factors), dtype=jnp.float32)
    item_emb = jax.random.normal(k2, (n_items, n_factors), dtype=jnp.float32)
    user_bias = jax.random.normal(k3, (n_users, 1), dtype=jnp.float32)
    item_bias = jax.random.normal(k4, (n_items, 1), dtype=jnp.float32)

    users = jax.random.randint(k5, (B,), 0, n_users, dtype=jnp.int32)
    pos_items = jax.random.randint(k6, (B,), 0, n_items, dtype=jnp.int32)
    neg_items = jax.random.randint(k7, (B,), 0, n_items, dtype=jnp.int32)

    out = bpr_forward(users, pos_items, neg_items,
                      user_emb, item_emb, user_bias, item_bias)
    out = jax.block_until_ready(out)

    ref = reference_forward(users, pos_items, neg_items,
                            user_emb, item_emb, user_bias, item_bias)
    assert out.shape == (B,)
    assert jnp.allclose(out, ref, atol=1e-4, rtol=1e-4), (out, ref)

    print("KERNEL_OK")
</pallas_src>

<mosaic_0001>
module attributes {stable_mosaic.version = 11 : i64} {
  func.func @_bpr_tile_kernel(%arg0: i32, %arg1: memref<8xi32, #tpu.memory_space<smem>>, %arg2: memref<8xi32, #tpu.memory_space<smem>>, %arg3: memref<8xi32, #tpu.memory_space<smem>>, %arg4: memref<16x128xf32, #tpu.memory_space<any>>, %arg5: memref<32x128xf32, #tpu.memory_space<any>>, %arg6: memref<1x8xf32, #tpu.memory_space<vmem>>, %arg7: memref<8x128xf32, #tpu.memory_space<vmem>>, %arg8: memref<8x128xf32, #tpu.memory_space<vmem>>, %arg9: memref<8x128xf32, #tpu.memory_space<vmem>>, %arg10: memref<3x!tpu.dma_semaphore, #tpu.memory_space<semaphore_mem>>) attributes {dimension_semantics = [#tpu.dimension_semantics<parallel>], iteration_bounds = array<i64: 1>, scalar_prefetch = 3 : i64, scratch_operands = 4 : i64, tpu.core_type = #tpu.core_type<tc>, window_params = [{}, {}, {transform_indices = @transform_2, window_bounds = array<i64: 1, 8>}]} {
    %c8_i32 = arith.constant 8 : i32
    %0 = arith.muli %arg0, %c8_i32 : i32
    %c0_i32 = arith.constant 0 : i32
    %c8_i32_0 = arith.constant 8 : i32
    %1 = arith.addi %c0_i32, %c8_i32_0 : i32
    %c1_i32 = arith.constant 1 : i32
    scf.for %arg11 = %c0_i32 to %1 step %c1_i32  : i32 {
      %c1_i32_14 = arith.constant 1 : i32
      %11 = arith.muli %arg11, %c1_i32_14 : i32
      %c0_i32_15 = arith.constant 0 : i32
      %12 = arith.addi %c0_i32_15, %11 : i32
      %13 = arith.addi %0, %12 : i32
      %14 = arith.index_cast %13 : i32 to index
      %15 = memref.load %arg1[%14] : memref<8xi32, #tpu.memory_space<smem>>
      %16 = arith.addi %0, %12 : i32
      %17 = arith.index_cast %16 : i32 to index
      %18 = memref.load %arg2[%17] : memref<8xi32, #tpu.memory_space<smem>>
      %19 = arith.addi %0, %12 : i32
      %20 = arith.index_cast %19 : i32 to index
      %21 = memref.load %arg3[%20] : memref<8xi32, #tpu.memory_space<smem>>
      %c0_i32_16 = arith.constant 0 : i32
      %c0_i32_17 = arith.constant 0 : i32
      %22 = tpu.memref_slice %arg4[%15, %c0_i32_17] : memref<16x128xf32, #tpu.memory_space<any>> -> memref<1x128xf32, #tpu.memory_space<any>>
      %c0_i32_18 = arith.constant 0 : i32
      %23 = tpu.memref_slice %arg7[%12, %c0_i32_18] : memref<8x128xf32, #tpu.memory_space<vmem>> -> memref<1x128xf32, #tpu.memory_space<vmem>>
      %24 = tpu.memref_slice %arg10[%c0_i32_16] : memref<3x!tpu.dma_semaphore, #tpu.memory_space<semaphore_mem>> -> memref<1x!tpu.dma_semaphore, #tpu.memory_space<semaphore_mem>>
      %25 = tpu.memref_squeeze %24 : memref<1x!tpu.dma_semaphore, #tpu.memory_space<semaphore_mem>> -> memref<!tpu.dma_semaphore, #tpu.memory_space<semaphore_mem>>
      tpu.enqueue_dma source(%22 : memref<1x128xf32, #tpu.memory_space<any>>) target(%23 : memref<1x128xf32, #tpu.memory_space<vmem>>) target_semaphore(%25 : memref<!tpu.dma_semaphore, #tpu.memory_space<semaphore_mem>>)
      %c1_i32_19 = arith.constant 1 : i32
      %c0_i32_20 = arith.constant 0 : i32
      %26 = tpu.memref_slice %arg5[%18, %c0_i32_20] : memref<32x128xf32, #tpu.memory_space<any>> -> memref<1x128xf32, #tpu.memory_space<any>>
      %c0_i32_21 = arith.constant 0 : i32
      %27 = tpu.memref_slice %arg8[%12, %c0_i32_21] : memref<8x128xf32, #tpu.memory_space<vmem>> -> memref<1x128xf32, #tpu.memory_space<vmem>>
      %28 = tpu.memref_slice %arg10[%c1_i32_19] : memref<3x!tpu.dma_semaphore, #tpu.memory_space<semaphore_mem>> -> memref<1x!tpu.dma_semaphore, #tpu.memory_space<semaphore_mem>>
      %29 = tpu.memref_squeeze %28 : memref<1x!tpu.dma_semaphore, #tpu.memory_space<semaphore_mem>> -> memref<!tpu.dma_semaphore, #tpu.memory_space<semaphore_mem>>
      tpu.enqueue_dma source(%26 : memref<1x128xf32, #tpu.memory_space<any>>) target(%27 : memref<1x128xf32, #tpu.memory_space<vmem>>) target_semaphore(%29 : memref<!tpu.dma_semaphore, #tpu.memory_space<semaphore_mem>>)
      %c2_i32 = arith.constant 2 : i32
      %c0_i32_22 = arith.constant 0 : i32
      %30 = tpu.memref_slice %arg5[%21, %c0_i32_22] : memref<32x128xf32, #tpu.memory_space<any>> -> memref<1x128xf32, #tpu.memory_space<any>>
      %c0_i32_23 = arith.constant 0 : i32
      %31 = tpu.memref_slice %arg9[%12, %c0_i32_23] : memref<8x128xf32, #tpu.memory_space<vmem>> -> memref<1x128xf32, #tpu.memory_space<vmem>>
      %32 = tpu.memref_slice %arg10[%c2_i32] : memref<3x!tpu.dma_semaphore, #tpu.memory_space<semaphore_mem>> -> memref<1x!tpu.dma_semaphore, #tpu.memory_space<semaphore_mem>>
      %33 = tpu.memref_squeeze %32 : memref<1x!tpu.dma_semaphore, #tpu.memory_space<semaphore_mem>> -> memref<!tpu.dma_semaphore, #tpu.memory_space<semaphore_mem>>
      tpu.enqueue_dma source(%30 : memref<1x128xf32, #tpu.memory_space<any>>) target(%31 : memref<1x128xf32, #tpu.memory_space<vmem>>) target_semaphore(%33 : memref<!tpu.dma_semaphore, #tpu.memory_space<semaphore_mem>>)
    }
    %c8_i32_1 = arith.constant 8 : i32
    %c0_i32_2 = arith.constant 0 : i32
    %c8_i32_3 = arith.constant 8 : i32
    %2 = arith.addi %c0_i32_2, %c8_i32_3 : i32
    %c1_i32_4 = arith.constant 1 : i32
    scf.for %arg11 = %c0_i32_2 to %2 step %c1_i32_4  : i32 {
      %c1_i32_14 = arith.constant 1 : i32
      %11 = arith.muli %arg11, %c1_i32_14 : i32
      %c0_i32_15 = arith.constant 0 : i32
      %12 = arith.addi %c0_i32_15, %11 : i32
      %c0_i32_16 = arith.constant 0 : i32
      %c0_i32_17 = arith.constant 0 : i32
      %c0_i32_18 = arith.constant 0 : i32
      %13 = tpu.memref_slice %arg4[%c0_i32_17, %c0_i32_18] : memref<16x128xf32, #tpu.memory_space<any>> -> memref<1x128xf32, #tpu.memory_space<any>>
      %c0_i32_19 = arith.constant 0 : i32
      %14 = tpu.memref_slice %arg7[%12, %c0_i32_19] : memref<8x128xf32, #tpu.memory_space<vmem>> -> memref<1x128xf32, #tpu.memory_space<vmem>>
      %15 = tpu.memref_slice %arg10[%c0_i32_16] : memref<3x!tpu.dma_semaphore, #tpu.memory_space<semaphore_mem>> -> memref<1x!tpu.dma_semaphore, #tpu.memory_space<semaphore_mem>>
      %16 = tpu.memref_squeeze %15 : memref<1x!tpu.dma_semaphore, #tpu.memory_space<semaphore_mem>> -> memref<!tpu.dma_semaphore, #tpu.memory_space<semaphore_mem>>
      tpu.wait_dma2 semaphore(%16 : memref<!tpu.dma_semaphore, #tpu.memory_space<semaphore_mem>>) src(%13 : memref<1x128xf32, #tpu.memory_space<any>>) dst(%14 : memref<1x128xf32, #tpu.memory_space<vmem>>)
      %c1_i32_20 = arith.constant 1 : i32
      %c0_i32_21 = arith.constant 0 : i32
      %c0_i32_22 = arith.constant 0 : i32
      %17 = tpu.memref_slice %arg5[%c0_i32_21, %c0_i32_22] : memref<32x128xf32, #tpu.memory_space<any>> -> memref<1x128xf32, #tpu.memory_space<any>>
      %c0_i32_23 = arith.constant 0 : i32
      %18 = tpu.memref_slice %arg8[%12, %c0_i32_23] : memref<8x128xf32, #tpu.memory_space<vmem>> -> memref<1x128xf32, #tpu.memory_space<vmem>>
      %19 = tpu.memref_slice %arg10[%c1_i32_20] : memref<3x!tpu.dma_semaphore, #tpu.memory_space<semaphore_mem>> -> memref<1x!tpu.dma_semaphore, #tpu.memory_space<semaphore_mem>>
      %20 = tpu.memref_squeeze %19 : memref<1x!tpu.dma_semaphore, #tpu.memory_space<semaphore_mem>> -> memref<!tpu.dma_semaphore, #tpu.memory_space<semaphore_mem>>
      tpu.wait_dma2 semaphore(%20 : memref<!tpu.dma_semaphore, #tpu.memory_space<semaphore_mem>>) src(%17 : memref<1x128xf32, #tpu.memory_space<any>>) dst(%18 : memref<1x128xf32, #tpu.memory_space<vmem>>)
      %c2_i32 = arith.constant 2 : i32
      %c0_i32_24 = arith.constant 0 : i32
      %c0_i32_25 = arith.constant 0 : i32
      %21 = tpu.memref_slice %arg5[%c0_i32_24, %c0_i32_25] : memref<32x128xf32, #tpu.memory_space<any>> -> memref<1x128xf32, #tpu.memory_space<any>>
      %c0_i32_26 = arith.constant 0 : i32
      %22 = tpu.memref_slice %arg9[%12, %c0_i32_26] : memref<8x128xf32, #tpu.memory_space<vmem>> -> memref<1x128xf32, #tpu.memory_space<vmem>>
      %23 = tpu.memref_slice %arg10[%c2_i32] : memref<3x!tpu.dma_semaphore, #tpu.memory_space<semaphore_mem>> -> memref<1x!tpu.dma_semaphore, #tpu.memory_space<semaphore_mem>>
      %24 = tpu.memref_squeeze %23 : memref<1x!tpu.dma_semaphore, #tpu.memory_space<semaphore_mem>> -> memref<!tpu.dma_semaphore, #tpu.memory_space<semaphore_mem>>
      tpu.wait_dma2 semaphore(%24 : memref<!tpu.dma_semaphore, #tpu.memory_space<semaphore_mem>>) src(%21 : memref<1x128xf32, #tpu.memory_space<any>>) dst(%22 : memref<1x128xf32, #tpu.memory_space<vmem>>)
    }
    %c8_i32_5 = arith.constant 8 : i32
    %c0 = arith.constant 0 : index
    %c0_6 = arith.constant 0 : index
    %3 = vector.load %arg7[%c0, %c0_6] : memref<8x128xf32, #tpu.memory_space<vmem>>, vector<8x128xf32>
    %c0_7 = arith.constant 0 : index
    %c0_8 = arith.constant 0 : index
    %4 = vector.load %arg8[%c0_7, %c0_8] : memref<8x128xf32, #tpu.memory_space<vmem>>, vector<8x128xf32>
    %c0_9 = arith.constant 0 : index
    %c0_10 = arith.constant 0 : index
    %5 = vector.load %arg9[%c0_9, %c0_10] : memref<8x128xf32, #tpu.memory_space<vmem>>, vector<8x128xf32>
    %6 = arith.subf %4, %5 : vector<8x128xf32>
    %7 = arith.mulf %3, %6 : vector<8x128xf32>
    %cst = arith.constant 1.000000e+00 : f32
    %8 = vector.broadcast %cst : f32 to vector<1x128xf32>
    "tpu.trace_start"() <{level = 10 : i32, message = "of,bf->ob"}> : () -> ()
    %cst_11 = arith.constant dense<0.000000e+00> : vector<1x8xf32>
    %9 = tpu.matmul %8, %7, %cst_11 {dimension_numbers = #tpu.dot_dimension_numbers<[1], [1], [0], [0], [0, 0, 1, 0], [], []>} : vector<1x128xf32>, vector<8x128xf32>, vector<1x8xf32> -> vector<1x8xf32>
    "tpu.trace_stop"() : () -> ()
    %c0_12 = arith.constant 0 : index
    %c0_13 = arith.constant 0 : index
    %10 = vector.load %arg6[%c0_12, %c0_13] : memref<1x8xf32, #tpu.memory_space<vmem>>, vector<1x8xf32>
    tpu.vector_store %arg6[%c0_12, %c0_13], %9 {strides = array<i32>} : memref<1x8xf32, #tpu.memory_space<vmem>>, vector<1x8xf32>,
    return
  }
  func.func @transform_2(%arg0: i32, %arg1: memref<8xi32, #tpu.memory_space<smem>>, %arg2: memref<8xi32, #tpu.memory_space<smem>>, %arg3: memref<8xi32, #tpu.memory_space<smem>>) -> (i32, i32) {
    %c0_i32 = arith.constant 0 : i32
    %c0_i32_0 = arith.constant 0 : i32
    return %c0_i32, %arg0 : i32, i32
  }
}

</mosaic_0001>

<llo_original>
// kernel: tpu_custom_call.1
$region0: #{tpu_custom_call.1}
  #allocation0 [shape = 'u32[]', space=smem, size = 0x4, offset = 0x4, fixed_abs, tag = 'smem constant byte address 0x4 - core index']
  #allocation1 [shape = 'u32[144,128]{1,0:T(1,128)}', space=vmem, size = 0x12000, scoped, tag = 'internal scratch']
  #allocation2 [shape = 'f32[8,128]{1,0:T(8,128)}', space=vmem, size = 0x1000, scoped, tag = 'scratch operand']
  #allocation3 [shape = 'f32[8,128]{1,0:T(8,128)}', space=vmem, size = 0x1000, scoped, tag = 'scratch operand']
  #allocation4 [shape = 'f32[8,128]{1,0:T(8,128)}', space=vmem, size = 0x1000, scoped, tag = 'scratch operand']
  #allocation5 [shape = 's32[3]{0}', space=sflag, size = 0xc, scoped, tag = 'scratch operand']
  #allocation6 [shape = 's32[1]{0}', space=sflag, size = 0x4, scoped, tag = 'scoped memory for tpu_custom_call.1']
  #allocation7 [shape = 'u8[512]{0}', space=smem, size = 0x200, scoped, tag = 'prefetched SMEM operand 0']
  #allocation8 [shape = 'u8[512]{0}', space=smem, size = 0x200, scoped, tag = 'prefetched SMEM operand 1']
  #allocation9 [shape = 'u8[512]{0}', space=smem, size = 0x200, scoped, tag = 'prefetched SMEM operand 2']
  #allocation12 [shape = 's32[]', space=sflag, size = 0x4, offset = 0, fixed_abs, tag = 'sflag constant byte address 0x0 - dummy sync flag']
  #allocation13 [shape = 's32[]', space=sflag, size = 0x4, offset = 0, fixed_abs, tag = 'sflag constant byte address 0x0 - dummy sync flag']
  #allocation14 [shape = 'u32[]', space=smem, size = 0x4, offset = 0x44, fixed_abs, tag = 'smem constant byte address 0x44 - assertion arg 0']
  #allocation15 [shape = 'u32[]', space=smem, size = 0x4, offset = 0x48, fixed_abs, tag = 'smem constant byte address 0x48 - assertion arg 1']
  #allocation16 [shape = 's32[]', space=sflag, size = 0x4, offset = 0, fixed_abs, tag = 'sflag constant byte address 0x0 - dummy sync flag']
  #allocation17 [shape = 's32[]', space=sflag, size = 0x4, offset = 0, fixed_abs, tag = 'sflag constant byte address 0x0 - dummy sync flag']
  #allocation18 [shape = 's32[]', space=sflag, size = 0x4, offset = 0, fixed_abs, tag = 'sflag constant byte address 0x0 - dummy sync flag']
  #allocation19 [shape = 's32[]', space=sflag, size = 0x4, offset = 0, fixed_abs, tag = 'sflag constant byte address 0x0 - dummy sync flag']
  %s0 = inlined_call_operand.hbm [shape: s32[8], index: 0, kind: input, shape index: {}]
  %s1 = inlined_call_operand.vmem [shape: s32[8], index: 1, kind: input, shape index: {}]
  %s2 = inlined_call_operand.vmem [shape: s32[8], index: 2, kind: input, shape index: {}]
  %s3 = inlined_call_operand.hbm [shape: f32[16,128], index: 3, kind: input, shape index: {}]
  %s4 = inlined_call_operand.hbm [shape: f32[32,128], index: 4, kind: input, shape index: {}]
  %s5 = inlined_call_operand.hbm [shape: f32[1,8], index: 5, kind: output, shape index: {}]
  %s6 = sld [smem:[#allocation0]]
  $region36: #{tpu_custom_call.1} parent=0
    _
  %s8 = ssub.s32 1, %s6
  %s9 = scalar_select 0, %s8, %s6
  %11 = dma.hbm_to_smem %s0, 16, [#allocation7], [#allocation6]
  %s12 = sshll.u32 %s1, 4
  %s13 = int_to_ptr.vmem [resolvable:$true] %s12
  %15 = dma.vmem_to_smem %s13, 16, [#allocation8], [#allocation6]
  %s16 = sshll.u32 %s2, 4
  %s17 = int_to_ptr.vmem [resolvable:$true] %s16
  %19 = dma.vmem_to_smem %s17, 16, [#allocation9], [#allocation6]
  %20 = dma.done [#allocation6], 48
  %21 = sfence
  $region1: #{tpu_custom_call.1} parent=0
    #allocation10 [shape = 'u8[512]{0}', space=vmem, size = 0x400, scoped, tag = 'output window, operand 0, single buffered']
    #allocation11 [shape = 's32[1]{0}', space=sflag, size = 0x4, scoped, tag = 'scoped memory for tpu_custom_call.1']
    %22 = vsyncpa [#allocation11], 0
    %s23 = smul.u32 0, 8
    loop: start=0, step=1, limit=8
    $region2: #{tpu_custom_call.1} parent=1 // loop_pre_header
      _
    $region3: #{tpu_custom_call.1} parent=1 // loop_header
      %s25 = sphi 0, %s29
      %p26 = scmp.ge.s32.totalorder %s25, 8
    $region4: #{tpu_custom_call.1} parent=1 // loop_header_branch
      %28 = sbr.rel (%p26) target = $region8
    $region5: #{tpu_custom_call.1} parent=1 // loop_body
      %s30 = sadd.s32 %s23, %s25
      %s31 = sld [smem:[#allocation7 + %s30]]
      %s32 = sld [smem:[#allocation8 + %s30]]
      %s33 = sld [smem:[#allocation9 + %s30]]
      %s34 = smul.addr %s31, 16
      %s35 = scalar_lea.hbm %s3, %s34
      %s36 = scalar_lea.vmem [#allocation2], %s25
      // Predicated region
      $region9: #{tpu_custom_call.1} parent=5 // pred_check
        _
      $region10: #{tpu_custom_call.1} parent=5 // pred_check_branch
        %38 = sbr.rel target = $region12
      $region11: #{tpu_custom_call.1} parent=5 // pred_region
        %39 = sst [smem:[#allocation14]] [#allocation13]
        %40 = sst [smem:[#allocation15]] [#allocation12]
      $region12: #{tpu_custom_call.1} parent=5 // pred_fallthru
        _
      %42 = shalt.err (0)
      %s44 = sshll.u32 %s36, 4
      %s45 = int_to_ptr.vmem [resolvable:$true] %s44
      %47 = dma.hbm_to_vmem [thread:$0]  %s35, 16, %s45, [#allocation5]
      %s48 = smul.addr %s32, 16
      %s49 = scalar_lea.hbm %s4, %s48
      %s50 = scalar_lea.vmem [#allocation3], %s25
      %s51 = scalar_lea.sflag [#allocation5], 1
      // Predicated region
      $region13: #{tpu_custom_call.1} parent=5 // pred_check
        _
      $region14: #{tpu_custom_call.1} parent=5 // pred_check_branch
        %53 = sbr.rel target = $region16
      $region15: #{tpu_custom_call.1} parent=5 // pred_region
        %54 = sst [smem:[#allocation14]] [#allocation17]
        %55 = sst [smem:[#allocation15]] [#allocation16]
      $region16: #{tpu_custom_call.1} parent=5 // pred_fallthru
        _
      %57 = shalt.err (0)
      %s59 = sshll.u32 %s50, 4
      %s60 = int_to_ptr.vmem [resolvable:$true] %s59
      %62 = dma.hbm_to_vmem [thread:$0]  %s49, 16, %s60, %s51
      %s63 = smul.addr %s33, 16
      %s64 = scalar_lea.hbm %s4, %s63
      %s65 = scalar_lea.vmem [#allocation4], %s25
      %s66 = scalar_lea.sflag [#allocation5], 2
      // Predicated region
      $region17: #{tpu_custom_call.1} parent=5 // pred_check
        _
      $region18: #{tpu_custom_call.1} parent=5 // pred_check_branch
        %68 = sbr.rel target = $region20
      $region19: #{tpu_custom_call.1} parent=5 // pred_region
        %69 = sst [smem:[#allocation14]] [#allocation19]
        %70 = sst [smem:[#allocation15]] [#allocation18]
      $region20: #{tpu_custom_call.1} parent=5 // pred_fallthru
        _
      %72 = shalt.err (0)
      %s74 = sshll.u32 %s65, 4
      %s75 = int_to_ptr.vmem [resolvable:$true] %s74
      %77 = dma.hbm_to_vmem [thread:$0]  %s64, 16, %s75, %s66
    $region6: #{tpu_custom_call.1} parent=1 // loop_footer
      %s29 = sadd.s32 1, %s25
    $region7: #{tpu_custom_call.1} parent=1 // loop_footer_branch
      %24 = sbr.rel target = $region3
    $region8: #{tpu_custom_call.1} parent=1 // loop_exit
      _
    loop: start=0, step=1, limit=8
    $region21: #{tpu_custom_call.1} parent=1 // loop_pre_header
      _
    $region22: #{tpu_custom_call.1} parent=1 // loop_header
      %s79 = sphi 0, %s83
      %p80 = scmp.ge.s32.totalorder %s79, 8
    $region23: #{tpu_custom_call.1} parent=1 // loop_header_branch
      %82 = sbr.rel (%p80) target = $region27
    $region24: #{tpu_custom_call.1} parent=1 // loop_body
      %s84 = smul.u32 1, 1
      %s85 = sshll.u32 %s84, 4
      %86 = dma.done [#allocation5], %s85
      %s87 = scalar_lea.sflag [#allocation5], 1
      %s88 = sshll.u32 %s84, 4
      %89 = dma.done %s87, %s88
      %s90 = scalar_lea.sflag [#allocation5], 2
      %s91 = sshll.u32 %s84, 4
      %92 = dma.done %s90, %s91
    $region25: #{tpu_custom_call.1} parent=1 // loop_footer
      %s83 = sadd.s32 1, %s79
    $region26: #{tpu_custom_call.1} parent=1 // loop_footer_branch
      %78 = sbr.rel target = $region22
    $region27: #{tpu_custom_call.1} parent=1 // loop_exit
      _
    %v93 = vld [vmem:[#allocation2] sm:$0xff]
    %v94 = vld [vmem:[#allocation3] sm:$0xff]
    %v95 = vld [vmem:[#allocation4] sm:$0xff]
    %v96 = vsub.f32 %v94, %v95
    %v97 = vmul.f32 %v93, %v96
    %98 = vmatprep.subr.mxu0 0.0
    %99 = vmatpush1.xpose.msra.mxu0 %v97
    %100 = vmatprep.subr.mxu0 0.0
    %101 = vmatpush1.xpose.msra.mxu0 0.0
    %102 = vmatprep.subr.mxu0 0.0
    %103 = vmatpush1.xpose.msra.mxu0 0.0
    %104 = vmatprep.subr.mxu0 0.0
    %105 = vmatpush1.xpose.msra.mxu0 0.0
    %106 = vmatprep.subr.mxu0 0.0
    %107 = vmatpush1.xpose.msra.mxu0 0.0
    %108 = vmatprep.subr.mxu0 0.0
    %109 = vmatpush1.xpose.msra.mxu0 0.0
    %110 = vmatprep.subr.mxu0 0.0
    %111 = vmatpush1.xpose.msra.mxu0 0.0
    %112 = vmatprep.subr.mxu0 0.0
    %113 = vmatpush1.xpose.msra.mxu0 0.0
    %114 = vmatprep.subr.mxu0 0.0
    %115 = vmatpush1.xpose.msra.mxu0 0.0
    %116 = vmatprep.subr.mxu0 0.0
    %117 = vmatpush1.xpose.msra.mxu0 0.0
    %118 = vmatprep.subr.mxu0 0.0
    %119 = vmatpush1.xpose.msra.mxu0 0.0
    %120 = vmatprep.subr.mxu0 0.0
    %121 = vmatpush1.xpose.msra.mxu0 0.0
    %122 = vmatprep.subr.mxu0 0.0
    %123 = vmatpush1.xpose.msra.mxu0 0.0
    %124 = vmatprep.subr.mxu0 0.0
    %125 = vmatpush1.xpose.msra.mxu0 0.0
    %126 = vmatprep.subr.mxu0 0.0
    %127 = vmatpush1.xpose.msra.mxu0 0.0
    %128 = vmatprep.subr.mxu0 0.0
    %129 = vmatpush1.xpose.msra.mxu0 0.0
    %130 = vmatprep.subr.mxu0 0.0
    %131 = vmatpush1.xpose.msra.mxu0 0.0
    %132 = vmatprep.subr.mxu0 0.0
    %133 = vmatpush1.xpose.msra.mxu0 0.0
    %134 = vmatprep.subr.mxu0 0.0
    %135 = vmatpush1.xpose.msra.mxu0 0.0
    %136 = vmatprep.subr.mxu0 0.0
    %137 = vmatpush1.xpose.msra.mxu0 0.0
    %138 = vmatprep.subr.mxu0 0.0
    %139 = vmatpush1.xpose.msra.mxu0 0.0
    %140 = vmatprep.subr.mxu0 0.0
    %141 = vmatpush1.xpose.msra.mxu0 0.0
    %142 = vmatprep.subr.mxu0 0.0
    %143 = vmatpush1.xpose.msra.mxu0 0.0
    %144 = vmatprep.subr.mxu0 0.0
    %145 = vmatpush1.xpose.msra.mxu0 0.0
    %146 = vmatprep.subr.mxu0 0.0
    %147 = vmatpush1.xpose.msra.mxu0 0.0
    %148 = vmatprep.subr.mxu0 0.0
    %149 = vmatpush1.xpose.msra.mxu0 0.0
    %150 = vmatprep.subr.mxu0 0.0
    %151 = vmatpush1.xpose.msra.mxu0 0.0
    %152 = vmatprep.subr.mxu0 0.0
    %153 = vmatpush1.xpose.msra.mxu0 0.0
    %154 = vmatprep.subr.mxu0 0.0
    %155 = vmatpush1.xpose.msra.mxu0 0.0
    %156 = vmatprep.subr.mxu0 0.0
    %157 = vmatpush1.xpose.msra.mxu0 0.0
    %158 = vmatprep.subr.mxu0 0.0
    %159 = vmatpush1.xpose.msra.mxu0 0.0
    %160 = vmatprep.subr.mxu0 0.0
    %161 = vmatpush1.xpose.msra.mxu0 0.0
    %162 = vmatprep.mubr.f32.mxu0 0.0
    %163 = vmatmul.mubr.f32.gmra.mrb[0].mxu0 1.0
    %v164 = vpop.f32.mrb[0].mxu0
    %v165 = vadd.f32 0.0, %v164
    %v166 = vpop.f32.mrb[0].mxu0
    %167 = vdwg.mxu0
    %vm168 = vcmask 57344
    %169 = vst.msk [vmem:[#allocation10] sm:$0x1] %vm168, %v165
    // Predicated region
    $region28: #{tpu_custom_call.1} parent=1 // pred_check
      _
    $region29: #{tpu_custom_call.1} parent=1 // pred_check_branch
      %171 = sbr.rel (0) target = $region31
    $region30: #{tpu_custom_call.1} parent=1 // pred_region
      %s173 = ssub.s32 16, 16
      %174 = vsyncadd [#allocation11], %s173
      %s176 = sshll.u32 [#allocation10], 4
      %s177 = int_to_ptr.vmem [resolvable:$true] %s176
      %179 = dma.vmem_to_hbm [thread:$0]  %s177, 16, %s5, [#allocation11]
    $region31: #{tpu_custom_call.1} parent=1 // pred_fallthru
      _
    // Predicated region
    $region32: #{tpu_custom_call.1} parent=1 // pred_check
      _
    $region33: #{tpu_custom_call.1} parent=1 // pred_check_branch
      %181 = sbr.rel (0) target = $region35
    $region34: #{tpu_custom_call.1} parent=1 // pred_region
      %182 = dma.done [#allocation11], 16
    $region35: #{tpu_custom_call.1} parent=1 // pred_fallthru
      _
    %183 = vsyncpa [#allocation11], 1
  %184 = vsyncmov [#allocation5]
  %s185 = vpop.sfrf %184
  %p186 = scmp.eq.s32.totalorder %s185, 0
  %p187 = pneg %p186
  %189 = shalt.err (%p187)
  %s190 = scalar_lea.sflag [#allocation5], 1
  %191 = vsyncmov %s190
  %s192 = vpop.sfrf %191
  %p193 = scmp.eq.s32.totalorder %s192, 0
  %p194 = pneg %p193
  %196 = shalt.err (%p194)
  %s197 = scalar_lea.sflag [#allocation5], 2
  %198 = vsyncmov %s197
  %s199 = vpop.sfrf %198
  %p200 = scmp.eq.s32.totalorder %s199, 0
  %p201 = pneg %p200
  %203 = shalt.err (%p201)

</llo_original>
